<compile_context>
chip_gen: v5e
topology: v5e:2x2
jax: 0.10.0
libtpu: 0.0.40
codegen_flags: <defaults>
</compile_context>

<pallas_src>
import functools
from typing import NamedTuple

import jax
import jax.numpy as jnp
from jax.experimental import pallas as pl
from jax.experimental.pallas import tpu as pltpu


# ----------------------------------------------------------------------------- helpers
def _round_up(n, m):
    return ((n + m - 1) // m) * m


def _cdiv(a, b):
    return -(-a // b)


def _pad_axis(a, axis, target):
    pad = target - a.shape[axis]
    if pad == 0:
        return a
    widths = [(0, 0)] * a.ndim
    widths[axis] = (0, pad)
    return jnp.pad(a, widths)


def default_compute_dtype():
    """bf16 MXU fast path on TPU (v5e/v6e/v7x); f32 elsewhere."""
    try:
        if jax.devices()[0].platform == "tpu":
            return jnp.bfloat16
    except Exception:  # pragma: no cover
        pass
    return jnp.float32


# ----------------------------------------------------------------------------- kernel
def _mlp_kernel(x_ref, w_ref, b_ref, o_ref):
    """Fused 4-layer MLP on one lane-dense (padded) batch tile.

    x_ref : [Bt, D]      compute dtype
    w_ref : [4, D, D]    compute dtype (zero-padded, stacked per layer)
    b_ref : [8, D]       float32       (rows 0..3 = biases, rows 4..7 = zero pad)
    o_ref : [Bt, D]      output dtype
    All matmuls accumulate in f32; bias adds are f32.
    """
    cdt = w_ref.dtype

    h = jnp.dot(x_ref[...], w_ref[0], preferred_element_type=jnp.float32)
    h = h + b_ref[0:1, :]
    # dropout1: identity (inference)
    h = jnp.dot(h.astype(cdt), w_ref[1], preferred_element_type=jnp.float32)
    h = h + b_ref[1:2, :]
    # dropout2: identity (inference)
    h = jnp.dot(h.astype(cdt), w_ref[2], preferred_element_type=jnp.float32)
    h = h + b_ref[2:3, :]
    y = jnp.dot(h.astype(cdt), w_ref[3], preferred_element_type=jnp.float32)
    y = y + b_ref[3:4, :]

    o_ref[...] = y.astype(o_ref.dtype)


# ----------------------------------------------------------------------------- params
class PreparedParams(NamedTuple):
    w_pack: jax.Array   # [4, D, D] compute dtype
    b_pack: jax.Array   # [8, D]    float32
    out_dim: int


def prepare_params(params, compute_dtype=None):
    """Pad/cast/pack weights ONCE (hoisted out of the per-call forward path).

    params: dict layer{1..4} -> (w_t [in,out], b [1,out] or [out]).
    """
    if compute_dtype is None:
        compute_dtype = default_compute_dtype()

    ws = [params[f"layer{i}"][0] for i in range(1, 5)]
    bs = [params[f"layer{i}"][1] for i in range(1, 5)]
    out_dim = int(ws[3].shape[1])

    dims = [int(ws[0].shape[0])] + [int(w.shape[1]) for w in ws]
    dmax = max(_round_up(d, 128) for d in dims)

    def pad_w(w):
        return _pad_axis(_pad_axis(w, 0, dmax), 1, dmax).astype(compute_dtype)

    def pad_b(b):
        return _pad_axis(jnp.reshape(b, (1, -1)), 1, dmax).astype(jnp.float32)

    w_pack = jnp.stack([pad_w(w) for w in ws])                       # [4, D, D]
    b_pack = jnp.concatenate([pad_b(b) for b in bs]
                             + [jnp.zeros((4, dmax), jnp.float32)])  # [8, D]

    # Materialize now so no pad/cast HLOs run on later forward calls.
    w_pack, b_pack = jax.block_until_ready((w_pack, b_pack))
    return PreparedParams(w_pack=w_pack, b_pack=b_pack, out_dim=out_dim)


# ----------------------------------------------------------------------------- forward
_SINGLE_CALL_MAX_B = 64   # above this, tile the batch with >= 2 parallel steps


@functools.partial(jax.jit, static_argnames=("out_dim", "max_block_b"))
def _forward_impl(x, w_pack, b_pack, *, out_dim, max_block_b=1024):
    B, _ = x.shape
    dmax = w_pack.shape[-1]
    cdt = w_pack.dtype

    # Activation padding (small, per-call): lane-pad features, sublane-pad batch.
    xp = _pad_axis(x, 1, dmax).astype(cdt)
    Bp = _round_up(B, 8)

    vmem_spec = pl.BlockSpec(memory_space=pltpu.MemorySpace.VMEM)

    if Bp <= _SINGLE_CALL_MAX_B:
        # Tiny batch: single invocation, no grid / pipelining bookkeeping.
        xp = _pad_axis(xp, 0, Bp)
        out = pl.pallas_call(
            _mlp_kernel,
            out_shape=jax.ShapeDtypeStruct((Bp, dmax), x.dtype),
            in_specs=[vmem_spec, vmem_spec, vmem_spec],
            out_specs=vmem_spec,
        )(xp, w_pack, b_pack)
    else:
        # Batch tiling: >= 2 grid steps (megacore on v7x), minimal padding.
        num_steps = max(2, _cdiv(Bp, max_block_b))
        block_b = _round_up(_cdiv(Bp, num_steps), 8)
        Bp = num_steps * block_b
        xp = _pad_axis(xp, 0, Bp)

        # Explicit VMEM budget with headroom; stays well under v7x's 64 MiB.
        w_bytes = w_pack.size * w_pack.dtype.itemsize
        b_bytes = b_pack.size * b_pack.dtype.itemsize
        x_tile = block_b * dmax * xp.dtype.itemsize
        o_tile = block_b * dmax * x.dtype.itemsize
        inter = 2 * block_b * dmax * 4                      # f32 intermediates
        need = 2 * (x_tile + o_tile + w_bytes + b_bytes) + inter
        vmem_limit = int(min(max(need + (4 << 20), 16 << 20), 48 << 20))

        out = pl.pallas_call(
            _mlp_kernel,
            out_shape=jax.ShapeDtypeStruct((Bp, dmax), x.dtype),
            grid_spec=pltpu.PrefetchScalarGridSpec(
                num_scalar_prefetch=0,
                grid=(num_steps,),
                in_specs=[
                    pl.BlockSpec((block_b, dmax), lambda i: (i, 0)),
                    # whole-array, constant index: fetched once (per core)
                    pl.BlockSpec(w_pack.shape, lambda i: (0, 0, 0)),
                    pl.BlockSpec(b_pack.shape, lambda i: (0, 0)),
                ],
                out_specs=pl.BlockSpec((block_b, dmax), lambda i: (i, 0)),
            ),
            compiler_params=pltpu.CompilerParams(
                dimension_semantics=("parallel",),
                vmem_limit_bytes=vmem_limit,
            ),
        )(xp, w_pack, b_pack)

    # Slice back to logical shape (drops zero-padded rows/lanes).
    return out[:B, :out_dim]


def neuralnetwork_forward(x, prepared: PreparedParams, *, max_block_b=1024):
    """x: [B, in_dim] float32; prepared: output of prepare_params()."""
    return _forward_impl(x, prepared.w_pack, prepared.b_pack,
                         out_dim=prepared.out_dim, max_block_b=max_block_b)


# ----------------------------------------------------------------------------- init / ref
def init_params(key, in_dim, n_hidden_1, n_hidden_2, n_hidden_3, out_dim,
                dtype=jnp.float32):
    """Init mimicking torch.nn.Linear default (U[-1/sqrt(fan_in), +])."""
    dims = [(in_dim, n_hidden_1), (n_hidden_1, n_hidden_2),
            (n_hidden_2, n_hidden_3), (n_hidden_3, out_dim)]
    params = {}
    for idx, (fan_in, fan_out) in enumerate(dims, start=1):
        key, kw, kb = jax.random.split(key, 3)
        bound = 1.0 / jnp.sqrt(jnp.array(fan_in, dtype=jnp.float32))
        w_t = jax.random.uniform(kw, (fan_in, fan_out), dtype, -bound, bound)
        b = jax.random.uniform(kb, (1, fan_out), dtype, -bound, bound)
        params[f"layer{idx}"] = (w_t, b)
    return params


def reference_forward(x, params):
    """Plain-JAX f32 reference (dropout = identity)."""
    h = x
    for name in ("layer1", "layer2", "layer3", "layer4"):
        w_t, b = params[name]
        h = h @ w_t + b
    return h


# ----------------------------------------------------------------------------- main
if __name__ == "__main__":
    key = jax.random.PRNGKey(0)

    in_dim = 64
    n_hidden_1, n_hidden_2, n_hidden_3, out_dim = 128, 128, 64, 32

    kp, kx, kx2 = jax.random.split(key, 3)
    params = init_params(kp, in_dim, n_hidden_1, n_hidden_2, n_hidden_3, out_dim)

    # --- small batch (single-invocation path) ---
    batch = 32
    x = jax.random.normal(kx, (batch, in_dim), dtype=jnp.float32)
    ref = reference_forward(x, params)

    # f32 compute: bit-tight vs reference.
    prepared_f32 = prepare_params(params, compute_dtype=jnp.float32)
    out_f32 = jax.block_until_ready(neuralnetwork_forward(x, prepared_f32))
    assert out_f32.shape == (batch, out_dim)
    assert jnp.allclose(out_f32, ref, atol=1e-4, rtol=1e-4), "f32 mismatch vs reference"

    # bf16 compute (default on TPU): relaxed tolerance for bf16 matmul rounding.
    prepared_bf16 = prepare_params(params, compute_dtype=jnp.bfloat16)
    out_bf16 = jax.block_until_ready(neuralnetwork_forward(x, prepared_bf16))
    assert out_bf16.shape == (batch, out_dim)
    assert jnp.allclose(out_bf16, ref, atol=3e-2, rtol=3e-2), "bf16 mismatch vs reference"

    # --- medium batch (gridded, >= 2 parallel steps path) ---
    batch2 = 300
    x2 = jax.random.normal(kx2, (batch2, in_dim), dtype=jnp.float32)
    ref2 = reference_forward(x2, params)
    out2 = jax.block_until_ready(neuralnetwork_forward(x2, prepared_bf16))
    assert out2.shape == (batch2, out_dim)
    assert jnp.allclose(out2, ref2, atol=3e-2, rtol=3e-2), "gridded bf16 mismatch"

    print("KERNEL_OK")
</pallas_src>

<mosaic_0001>
module attributes {stable_mosaic.version = 11 : i64} {
  func.func @_mlp_kernel(%arg0: memref<32x128xf32, #tpu.memory_space<vmem>>, %arg1: memref<4x128x128xf32, #tpu.memory_space<vmem>>, %arg2: memref<8x128xf32, #tpu.memory_space<vmem>>, %arg3: memref<32x128xf32, #tpu.memory_space<vmem>>) attributes {dimension_semantics = [], scalar_prefetch = 0 : i64, scratch_operands = 0 : i64, tpu.core_type = #tpu.core_type<tc>} {
    %c0 = arith.constant 0 : index
    %c0_0 = arith.constant 0 : index
    %0 = vector.load %arg0[%c0, %c0_0] : memref<32x128xf32, #tpu.memory_space<vmem>>, vector<32x128xf32>
    %c0_1 = arith.constant 0 : index
    %c0_2 = arith.constant 0 : index
    %c0_3 = arith.constant 0 : index
    %1 = vector.load %arg1[%c0_1, %c0_2, %c0_3] : memref<4x128x128xf32, #tpu.memory_space<vmem>>, vector<1x128x128xf32>
    %2 = vector.shape_cast %1 : vector<1x128x128xf32> to vector<128x128xf32>
    %cst = arith.constant dense<0.000000e+00> : vector<32x128xf32>
    %3 = tpu.matmul %0, %2, %cst {dimension_numbers = #tpu.dot_dimension_numbers<[1], [0], [0], [1], [0, 0, 1, 1], [], []>} : vector<32x128xf32>, vector<128x128xf32>, vector<32x128xf32> -> vector<32x128xf32>
    %c0_4 = arith.constant 0 : index
    %c0_5 = arith.constant 0 : index
    %4 = vector.load %arg2[%c0_4, %c0_5] : memref<8x128xf32, #tpu.memory_space<vmem>>, vector<1x128xf32>
    %5 = vector.broadcast %4 : vector<1x128xf32> to vector<32x128xf32>
    %6 = arith.addf %3, %5 : vector<32x128xf32>
    %c1 = arith.constant 1 : index
    %c0_6 = arith.constant 0 : index
    %c0_7 = arith.constant 0 : index
    %7 = vector.load %arg1[%c1, %c0_6, %c0_7] : memref<4x128x128xf32, #tpu.memory_space<vmem>>, vector<1x128x128xf32>
    %8 = vector.shape_cast %7 : vector<1x128x128xf32> to vector<128x128xf32>
    %cst_8 = arith.constant dense<0.000000e+00> : vector<32x128xf32>
    %9 = tpu.matmul %6, %8, %cst_8 {dimension_numbers = #tpu.dot_dimension_numbers<[1], [0], [0], [1], [0, 0, 1, 1], [], []>} : vector<32x128xf32>, vector<128x128xf32>, vector<32x128xf32> -> vector<32x128xf32>
    %c1_9 = arith.constant 1 : index
    %c0_10 = arith.constant 0 : index
    %10 = vector.load %arg2[%c1_9, %c0_10] : memref<8x128xf32, #tpu.memory_space<vmem>>, vector<1x128xf32>
    %11 = vector.broadcast %10 : vector<1x128xf32> to vector<32x128xf32>
    %12 = arith.addf %9, %11 : vector<32x128xf32>
    %c2 = arith.constant 2 : index
    %c0_11 = arith.constant 0 : index
    %c0_12 = arith.constant 0 : index
    %13 = vector.load %arg1[%c2, %c0_11, %c0_12] : memref<4x128x128xf32, #tpu.memory_space<vmem>>, vector<1x128x128xf32>
    %14 = vector.shape_cast %13 : vector<1x128x128xf32> to vector<128x128xf32>
    %cst_13 = arith.constant dense<0.000000e+00> : vector<32x128xf32>
    %15 = tpu.matmul %12, %14, %cst_13 {dimension_numbers = #tpu.dot_dimension_numbers<[1], [0], [0], [1], [0, 0, 1, 1], [], []>} : vector<32x128xf32>, vector<128x128xf32>, vector<32x128xf32> -> vector<32x128xf32>
    %c2_14 = arith.constant 2 : index
    %c0_15 = arith.constant 0 : index
    %16 = vector.load %arg2[%c2_14, %c0_15] : memref<8x128xf32, #tpu.memory_space<vmem>>, vector<1x128xf32>
    %17 = vector.broadcast %16 : vector<1x128xf32> to vector<32x128xf32>
    %18 = arith.addf %15, %17 : vector<32x128xf32>
    %c3 = arith.constant 3 : index
    %c0_16 = arith.constant 0 : index
    %c0_17 = arith.constant 0 : index
    %19 = vector.load %arg1[%c3, %c0_16, %c0_17] : memref<4x128x128xf32, #tpu.memory_space<vmem>>, vector<1x128x128xf32>
    %20 = vector.shape_cast %19 : vector<1x128x128xf32> to vector<128x128xf32>
    %cst_18 = arith.constant dense<0.000000e+00> : vector<32x128xf32>
    %21 = tpu.matmul %18, %20, %cst_18 {dimension_numbers = #tpu.dot_dimension_numbers<[1], [0], [0], [1], [0, 0, 1, 1], [], []>} : vector<32x128xf32>, vector<128x128xf32>, vector<32x128xf32> -> vector<32x128xf32>
    %c3_19 = arith.constant 3 : index
    %c0_20 = arith.constant 0 : index
    %22 = vector.load %arg2[%c3_19, %c0_20] : memref<8x128xf32, #tpu.memory_space<vmem>>, vector<1x128xf32>
    %23 = vector.broadcast %22 : vector<1x128xf32> to vector<32x128xf32>
    %24 = arith.addf %21, %23 : vector<32x128xf32>
    %c0_21 = arith.constant 0 : index
    %c0_22 = arith.constant 0 : index
    %25 = vector.load %arg3[%c0_21, %c0_22] : memref<32x128xf32, #tpu.memory_space<vmem>>, vector<32x128xf32>
    tpu.vector_store %arg3[%c0_21, %c0_22], %24 {strides = array<i32>} : memref<32x128xf32, #tpu.memory_space<vmem>>, vector<32x128xf32>,
    return
  }
}

</mosaic_0001>

<llo_original>
// kernel: _forward_impl.1
$region0: #{_forward_impl.1}
  #allocation0 [shape = 'u32[]', space=smem, size = 0x4, offset = 0x4, fixed_abs, tag = 'smem constant byte address 0x4 - core index']
  #allocation1 [shape = 'u32[72,128]{1,0:T(1,128)}', space=vmem, size = 0x9000, scoped, tag = 'internal scratch']
  %s0 = inlined_call_operand.vmem [shape: f32[32,128], index: 0, kind: input, shape index: {}]
  %s1 = inlined_call_operand.hbm [shape: f32[4,128,128], index: 1, kind: input, shape index: {}]
  %s2 = inlined_call_operand.vmem [shape: f32[8,128], index: 2, kind: input, shape index: {}]
  %s3 = inlined_call_operand.hbm [shape: f32[32,128], index: 3, kind: output, shape index: {}]
  %s4 = sld [smem:[#allocation0]]
  $region26: #{_forward_impl.1} parent=0
    _
  %s6 = ssub.s32 1, %s4
  %s7 = scalar_select 0, %s6, %s4
  $region1: #{_forward_impl.1} parent=0
    #allocation2 [shape = 'u8[262144]{0}', space=vmem, size = 0x40000, scoped, tag = 'input window, operand 1, single buffered']
    #allocation3 [shape = 's32[1]{0}', space=sflag, size = 0x4, scoped, tag = 'scoped memory for _forward_impl.1']
    #allocation4 [shape = 's32[1]{0}', space=sflag, size = 0x4, scoped, tag = 'scoped memory for _forward_impl.1']
    #allocation5 [shape = 'u8[16384]{0}', space=vmem, size = 0x4000, scoped, tag = 'output window, operand 0, single buffered']
    %8 = vsyncpa [#allocation3], 0
    %9 = vsyncpa [#allocation4], 0
    // Predicated region
    $region2: #{_forward_impl.1} parent=1 // pred_check
      _
    $region3: #{_forward_impl.1} parent=1 // pred_check_branch
      %11 = sbr.rel (0) target = $region5
    $region4: #{_forward_impl.1} parent=1 // pred_region
      _
    $region5: #{_forward_impl.1} parent=1 // pred_fallthru
      _
    // Predicated region
    $region6: #{_forward_impl.1} parent=1 // pred_check
      _
    $region7: #{_forward_impl.1} parent=1 // pred_check_branch
      %13 = sbr.rel (0) target = $region9
    $region8: #{_forward_impl.1} parent=1 // pred_region
      %15 = vsyncadd [#allocation3], 0
      %s16 = sshll.u32 %s1, 4
      %s17 = int_to_ptr.hbm [resolvable:$true] %s16
      %s18 = sshll.u32 [#allocation2], 4
      %s19 = int_to_ptr.vmem [resolvable:$true] %s18
      %24 = dma.hbm_to_vmem [thread:$0]  %s17, 8192, %s19, [#allocation3], 128, 128, 8
    $region9: #{_forward_impl.1} parent=1 // pred_fallthru
      _
    // Predicated region
    $region10: #{_forward_impl.1} parent=1 // pred_check
      _
    $region11: #{_forward_impl.1} parent=1 // pred_check_branch
      %26 = sbr.rel (0) target = $region13
    $region12: #{_forward_impl.1} parent=1 // pred_region
      _
    $region13: #{_forward_impl.1} parent=1 // pred_fallthru
      _
    // Predicated region
    $region14: #{_forward_impl.1} parent=1 // pred_check
      _
    $region15: #{_forward_impl.1} parent=1 // pred_check_branch
      %28 = sbr.rel (0) target = $region17
    $region16: #{_forward_impl.1} parent=1 // pred_region
      %30 = dma.done [#allocation3], 8192
    $region17: #{_forward_impl.1} parent=1 // pred_fallthru
      _
    %v31 = vld [vmem:[%s0] sm:$0xff]
    %v32 = vld [vmem:[%s0 + $0x8] sm:$0xff]
    %v33 = vld [vmem:[%s0 + $0x10] sm:$0xff]
    %v34 = vld [vmem:[%s0 + $0x18] sm:$0xff]
    %v35 = vld [vmem:[#allocation2] sm:$0xff]
    %v36 = vld [vmem:[#allocation2 + $0x8] sm:$0xff]
    %v37 = vld [vmem:[#allocation2 + $0x10] sm:$0xff]
    %v38 = vld [vmem:[#allocation2 + $0x18] sm:$0xff]
    %v39 = vld [vmem:[#allocation2 + $0x20] sm:$0xff]
    %v40 = vld [vmem:[#allocation2 + $0x28] sm:$0xff]
    %v41 = vld [vmem:[#allocation2 + $0x30] sm:$0xff]
    %v42 = vld [vmem:[#allocation2 + $0x38] sm:$0xff]
    %v43 = vld [vmem:[#allocation2 + $0x40] sm:$0xff]
    %v44 = vld [vmem:[#allocation2 + $0x48] sm:$0xff]
    %v45 = vld [vmem:[#allocation2 + $0x50] sm:$0xff]
    %v46 = vld [vmem:[#allocation2 + $0x58] sm:$0xff]
    %v47 = vld [vmem:[#allocation2 + $0x60] sm:$0xff]
    %v48 = vld [vmem:[#allocation2 + $0x68] sm:$0xff]
    %v49 = vld [vmem:[#allocation2 + $0x70] sm:$0xff]
    %v50 = vld [vmem:[#allocation2 + $0x78] sm:$0xff]
    %v51 = vld [vmem:[%s2] sm:$0x1]
    %v52 = vperm.slane %v51, 0
    %53 = vmatpush.msra.mxu0 %v50
    %54 = vmatpush.msra.mxu0 %v49
    %55 = vmatpush.msra.mxu0 %v48
    %56 = vmatpush.msra.mxu0 %v47
    %57 = vmatpush.msra.mxu0 %v46
    %58 = vmatpush.msra.mxu0 %v45
    %59 = vmatpush.msra.mxu0 %v44
    %60 = vmatpush.msra.mxu0 %v43
    %61 = vmatpush.msra.mxu0 %v42
    %62 = vmatpush.msra.mxu0 %v41
    %63 = vmatpush.msra.mxu0 %v40
    %64 = vmatpush.msra.mxu0 %v39
    %65 = vmatpush.msra.mxu0 %v38
    %66 = vmatpush.msra.mxu0 %v37
    %67 = vmatpush.msra.mxu0 %v36
    %68 = vmatpush.msra.mxu0 %v35
    %69 = vmatmul.f32.gmra.mxu0 %v31
    %v70 = vpop.f32.mrf.mxu0
    %v71 = vadd.f32 %v52, %v70
    %72 = vmatmul.f32.gmra.mxu0 %v32
    %v73 = vpop.f32.mrf.mxu0
    %v74 = vadd.f32 %v52, %v73
    %75 = vmatmul.f32.gmra.mxu0 %v33
    %v76 = vpop.f32.mrf.mxu0
    %v77 = vadd.f32 %v52, %v76
    %78 = vmatmul.f32.gmra.mxu0 %v34
    %v79 = vpop.f32.mrf.mxu0
    %v80 = vadd.f32 %v52, %v79
    %81 = vdwg.mxu0
    %s82 = scalar_lea.vmem [#allocation2], 128
    %v83 = vld [vmem:[%s82] sm:$0xff]
    %v84 = vld [vmem:[%s82 + $0x8] sm:$0xff]
    %v85 = vld [vmem:[%s82 + $0x10] sm:$0xff]
    %v86 = vld [vmem:[%s82 + $0x18] sm:$0xff]
    %v87 = vld [vmem:[%s82 + $0x20] sm:$0xff]
    %v88 = vld [vmem:[%s82 + $0x28] sm:$0xff]
    %v89 = vld [vmem:[%s82 + $0x30] sm:$0xff]
    %v90 = vld [vmem:[%s82 + $0x38] sm:$0xff]
    %v91 = vld [vmem:[%s82 + $0x40] sm:$0xff]
    %v92 = vld [vmem:[%s82 + $0x48] sm:$0xff]
    %v93 = vld [vmem:[%s82 + $0x50] sm:$0xff]
    %v94 = vld [vmem:[%s82 + $0x58] sm:$0xff]
    %v95 = vld [vmem:[%s82 + $0x60] sm:$0xff]
    %v96 = vld [vmem:[%s82 + $0x68] sm:$0xff]
    %v97 = vld [vmem:[%s82 + $0x70] sm:$0xff]
    %v98 = vld [vmem:[%s82 + $0x78] sm:$0xff]
    %v99 = vld [vmem:[%s2 + $0x1] sm:$0x1]
    %v100 = vperm.slane %v99, 0
    %101 = vmatpush.msra.mxu0 %v98
    %102 = vmatpush.msra.mxu0 %v97
    %103 = vmatpush.msra.mxu0 %v96
    %104 = vmatpush.msra.mxu0 %v95
    %105 = vmatpush.msra.mxu0 %v94
    %106 = vmatpush.msra.mxu0 %v93
    %107 = vmatpush.msra.mxu0 %v92
    %108 = vmatpush.msra.mxu0 %v91
    %109 = vmatpush.msra.mxu0 %v90
    %110 = vmatpush.msra.mxu0 %v89
    %111 = vmatpush.msra.mxu0 %v88
    %112 = vmatpush.msra.mxu0 %v87
    %113 = vmatpush.msra.mxu0 %v86
    %114 = vmatpush.msra.mxu0 %v85
    %115 = vmatpush.msra.mxu0 %v84
    %116 = vmatpush.msra.mxu0 %v83
    %117 = vmatmul.f32.gmra.mxu0 %v71
    %v118 = vpop.f32.mrf.mxu0
    %v119 = vadd.f32 %v100, %v118
    %120 = vmatmul.f32.gmra.mxu0 %v74
    %v121 = vpop.f32.mrf.mxu0
    %v122 = vadd.f32 %v100, %v121
    %123 = vmatmul.f32.gmra.mxu0 %v77
    %v124 = vpop.f32.mrf.mxu0
    %v125 = vadd.f32 %v100, %v124
    %126 = vmatmul.f32.gmra.mxu0 %v80
    %v127 = vpop.f32.mrf.mxu0
    %v128 = vadd.f32 %v100, %v127
    %129 = vdwg.mxu0
    %s130 = scalar_lea.vmem [#allocation2], 256
    %v131 = vld [vmem:[%s130] sm:$0xff]
    %v132 = vld [vmem:[%s130 + $0x8] sm:$0xff]
    %v133 = vld [vmem:[%s130 + $0x10] sm:$0xff]
    %v134 = vld [vmem:[%s130 + $0x18] sm:$0xff]
    %v135 = vld [vmem:[%s130 + $0x20] sm:$0xff]
    %v136 = vld [vmem:[%s130 + $0x28] sm:$0xff]
    %v137 = vld [vmem:[%s130 + $0x30] sm:$0xff]
    %v138 = vld [vmem:[%s130 + $0x38] sm:$0xff]
    %v139 = vld [vmem:[%s130 + $0x40] sm:$0xff]
    %v140 = vld [vmem:[%s130 + $0x48] sm:$0xff]
    %v141 = vld [vmem:[%s130 + $0x50] sm:$0xff]
    %v142 = vld [vmem:[%s130 + $0x58] sm:$0xff]
    %v143 = vld [vmem:[%s130 + $0x60] sm:$0xff]
    %v144 = vld [vmem:[%s130 + $0x68] sm:$0xff]
    %v145 = vld [vmem:[%s130 + $0x70] sm:$0xff]
    %v146 = vld [vmem:[%s130 + $0x78] sm:$0xff]
    %v147 = vld [vmem:[%s2 + $0x2] sm:$0x1]
    %v148 = vperm.slane %v147, 0
    %149 = vmatpush.msra.mxu0 %v146
    %150 = vmatpush.msra.mxu0 %v145
    %151 = vmatpush.msra.mxu0 %v144
    %152 = vmatpush.msra.mxu0 %v143
    %153 = vmatpush.msra.mxu0 %v142
    %154 = vmatpush.msra.mxu0 %v141
    %155 = vmatpush.msra.mxu0 %v140
    %156 = vmatpush.msra.mxu0 %v139
    %157 = vmatpush.msra.mxu0 %v138
    %158 = vmatpush.msra.mxu0 %v137
    %159 = vmatpush.msra.mxu0 %v136
    %160 = vmatpush.msra.mxu0 %v135
    %161 = vmatpush.msra.mxu0 %v134
    %162 = vmatpush.msra.mxu0 %v133
    %163 = vmatpush.msra.mxu0 %v132
    %164 = vmatpush.msra.mxu0 %v131
    %165 = vmatmul.f32.gmra.mxu0 %v119
    %v166 = vpop.f32.mrf.mxu0
    %v167 = vadd.f32 %v148, %v166
    %168 = vmatmul.f32.gmra.mxu0 %v122
    %v169 = vpop.f32.mrf.mxu0
    %v170 = vadd.f32 %v148, %v169
    %171 = vmatmul.f32.gmra.mxu0 %v125
    %v172 = vpop.f32.mrf.mxu0
    %v173 = vadd.f32 %v148, %v172
    %174 = vmatmul.f32.gmra.mxu0 %v128
    %v175 = vpop.f32.mrf.mxu0
    %v176 = vadd.f32 %v148, %v175
    %177 = vdwg.mxu0
    %s178 = scalar_lea.vmem [#allocation2], 384
    %v179 = vld [vmem:[%s178] sm:$0xff]
    %v180 = vld [vmem:[%s178 + $0x8] sm:$0xff]
    %v181 = vld [vmem:[%s178 + $0x10] sm:$0xff]
    %v182 = vld [vmem:[%s178 + $0x18] sm:$0xff]
    %v183 = vld [vmem:[%s178 + $0x20] sm:$0xff]
    %v184 = vld [vmem:[%s178 + $0x28] sm:$0xff]
    %v185 = vld [vmem:[%s178 + $0x30] sm:$0xff]
    %v186 = vld [vmem:[%s178 + $0x38] sm:$0xff]
    %v187 = vld [vmem:[%s178 + $0x40] sm:$0xff]
    %v188 = vld [vmem:[%s178 + $0x48] sm:$0xff]
    %v189 = vld [vmem:[%s178 + $0x50] sm:$0xff]
    %v190 = vld [vmem:[%s178 + $0x58] sm:$0xff]
    %v191 = vld [vmem:[%s178 + $0x60] sm:$0xff]
    %v192 = vld [vmem:[%s178 + $0x68] sm:$0xff]
    %v193 = vld [vmem:[%s178 + $0x70] sm:$0xff]
    %v194 = vld [vmem:[%s178 + $0x78] sm:$0xff]
    %v195 = vld [vmem:[%s2 + $0x3] sm:$0x1]
    %v196 = vperm.slane %v195, 0
    %197 = vmatpush.msra.mxu0 %v194
    %198 = vmatpush.msra.mxu0 %v193
    %199 = vmatpush.msra.mxu0 %v192
    %200 = vmatpush.msra.mxu0 %v191
    %201 = vmatpush.msra.mxu0 %v190
    %202 = vmatpush.msra.mxu0 %v189
    %203 = vmatpush.msra.mxu0 %v188
    %204 = vmatpush.msra.mxu0 %v187
    %205 = vmatpush.msra.mxu0 %v186
    %206 = vmatpush.msra.mxu0 %v185
    %207 = vmatpush.msra.mxu0 %v184
    %208 = vmatpush.msra.mxu0 %v183
    %209 = vmatpush.msra.mxu0 %v182
    %210 = vmatpush.msra.mxu0 %v181
    %211 = vmatpush.msra.mxu0 %v180
    %212 = vmatpush.msra.mxu0 %v179
    %213 = vmatmul.f32.gmra.mxu0 %v167
    %v214 = vpop.f32.mrf.mxu0
    %v215 = vadd.f32 %v196, %v214
    %216 = vmatmul.f32.gmra.mxu0 %v170
    %v217 = vpop.f32.mrf.mxu0
    %v218 = vadd.f32 %v196, %v217
    %219 = vmatmul.f32.gmra.mxu0 %v173
    %v220 = vpop.f32.mrf.mxu0
    %v221 = vadd.f32 %v196, %v220
    %222 = vmatmul.f32.gmra.mxu0 %v176
    %v223 = vpop.f32.mrf.mxu0
    %v224 = vadd.f32 %v196, %v223
    %225 = vdwg.mxu0
    %226 = vst [vmem:[#allocation5] sm:$0xff] %v215
    %227 = vst [vmem:[#allocation5 + $0x8] sm:$0xff] %v218
    %228 = vst [vmem:[#allocation5 + $0x10] sm:$0xff] %v221
    %229 = vst [vmem:[#allocation5 + $0x18] sm:$0xff] %v224
    // Predicated region
    $region18: #{_forward_impl.1} parent=1 // pred_check
      _
    $region19: #{_forward_impl.1} parent=1 // pred_check_branch
      %231 = sbr.rel (0) target = $region21
    $region20: #{_forward_impl.1} parent=1 // pred_region
      %233 = vsyncadd [#allocation4], 0
      %s234 = sshll.u32 [#allocation5], 4
      %s235 = int_to_ptr.vmem [resolvable:$true] %s234
      %s236 = sshll.u32 %s3, 4
      %s237 = int_to_ptr.hbm [resolvable:$true] %s236
      %242 = dma.vmem_to_hbm [thread:$0]  %s235, 512, %s237, [#allocation4], 128, 128, 8
    $region21: #{_forward_impl.1} parent=1 // pred_fallthru
      _
    // Predicated region
    $region22: #{_forward_impl.1} parent=1 // pred_check
      _
    $region23: #{_forward_impl.1} parent=1 // pred_check_branch
      %244 = sbr.rel (0) target = $region25
    $region24: #{_forward_impl.1} parent=1 // pred_region
      %246 = dma.done [#allocation4], 512
    $region25: #{_forward_impl.1} parent=1 // pred_fallthru
      _
    %247 = vsyncpa [#allocation3], 1
    %248 = vsyncpa [#allocation4], 1

</llo_original>
